<compile_context>
chip_gen: v7x
topology: tpu7x:2x2x1
jax: 0.10.0
libtpu: 0.0.40
codegen_flags: <defaults>
</compile_context>

<pallas_src>
import functools

import jax
import jax.numpy as jnp
from jax.experimental import pallas as pl
from jax.experimental.pallas import tpu as pltpu

_EPS = 1e-6


@functools.lru_cache(maxsize=1)
def _tpu_budget():
    """Per-generation block-size / VMEM budget.

    v7x:    64 MiB VMEM per TensorCore, 2 TCs/chip -> smaller blocks, 48 MiB limit.
    v5e/v6e: 128 MiB VMEM, 1 TC/chip               -> bigger blocks, 64 MiB limit.
    """
    vmem_bytes = None
    try:
        vmem_bytes = int(pltpu.get_tpu_info().vmem_capacity_bytes)
    except Exception:
        vmem_bytes = None
    if vmem_bytes is not None and vmem_bytes <= (96 << 20):
        return {"num_tc": 2, "block_cap": 2 << 20, "vmem_limit": 48 << 20}
    if vmem_bytes is not None:
        return {"num_tc": 1, "block_cap": 4 << 20, "vmem_limit": 64 << 20}
    # Unknown backend (interpret mode / emulation): conservative defaults.
    return {"num_tc": 1, "block_cap": 2 << 20, "vmem_limit": 48 << 20}


def _dice_sums_kernel(x_ref, lab_ref, out_ref, *, use_sigmoid, chunk,
                      chunks_per_super, num_valid):
    """One grid step: normalize a (C, chunk) logits tile, one-hot the labels,
    lane-reduce and fold into the resident (C, 3) accumulator block:
      out[:, 0] += sum(p * t);  out[:, 1] += sum(p * p);  out[:, 2] += sum(t)

    Grid = (N, num_super, chunks_per_super); the last axis is the reduction.
    """
    s = pl.program_id(1)
    k = pl.program_id(2)

    @pl.when(k == 0)
    def _init():
        out_ref[...] = jnp.zeros_like(out_ref)

    C = x_ref.shape[0]

    # Validity mask for this chunk (ragged tail + clamped duplicate chunks of
    # the last super-block).  raw_chunk is the un-clamped chunk index.
    raw_chunk = s * chunks_per_super + k
    base = raw_chunk * chunk
    lane = jax.lax.broadcasted_iota(jnp.int32, (1, chunk), 1)
    valid = (base + lane) < num_valid                  # (1, chunk) bool
    validf = valid.astype(jnp.float32)

    x = x_ref[...].astype(jnp.float32)
    if use_sigmoid:
        # No pre-mask needed: invalid lanes are killed below via validf / mask_c.
        p = jax.nn.sigmoid(x)
    else:
        # nn.Softmax(dim=1): class axis is the sublane axis of the tile.
        # Keep the pre-mask here so padded/duplicate lanes can't feed exp.
        x = jnp.where(valid, x, 0.0)
        m = jnp.max(x, axis=0, keepdims=True)
        e = jnp.exp(x - m)
        denom = jnp.sum(e, axis=0, keepdims=True)
        p = e * pl.reciprocal(denom, approx=True)      # EUP slot, frees VALU

    lab = lab_ref[...].astype(jnp.int32)               # (1, chunk)
    cls = jax.lax.broadcasted_iota(jnp.int32, (C, chunk), 0)
    mask_c = (lab == cls) & valid                      # one-hot AND valid

    pm = p * validf                                    # mask p once (for p*p)
    pt_sum = jnp.sum(jnp.where(mask_c, p, 0.0), axis=1, keepdims=True)
    pp_sum = jnp.sum(pm * pm, axis=1, keepdims=True)
    t_sum = jnp.sum(mask_c.astype(jnp.float32), axis=1, keepdims=True)  # t*t == t

    # Single fused update of the tiny resident accumulator (one load + store).
    out_ref[...] += jnp.concatenate([pt_sum, pp_sum, t_sum], axis=1)


def _per_channel_dice_sums(logits_ncm, labels_n1m, *, use_sigmoid,
                           chunk=None, num_super=None):
    """logits_ncm: (N, C, M) float, labels_n1m: (N, 1, M) int.

    Returns (C, 3) f32: columns are [sum(p*t), sum(p*p), sum(t*t)] per channel.
    """
    N, C, M = logits_ncm.shape
    assert labels_n1m.shape == (N, 1, M)
    budget = _tpu_budget()

    # Rare fallback: pad the voxel axis to a lane multiple so every block's
    # lane dim is 128-divisible.  The in-kernel mask (based on the true M)
    # ignores the padded tail, so pad values are irrelevant.
    Mp = pl.cdiv(M, 128) * 128
    if Mp != M:
        logits_ncm = jnp.pad(logits_ncm, ((0, 0), (0, 0), (0, Mp - M)))
        labels_n1m = jnp.pad(labels_n1m, ((0, 0), (0, 0), (0, Mp - M)))

    # Block sizing: target `block_cap` bytes per sublane-padded logits tile so
    # the ~0.35 us per-grid-step overhead is amortized against a multi-us DMA,
    # while the double-buffered tiles plus their f32 intermediates stay well
    # inside scoped VMEM on every generation.
    c_pad = pl.cdiv(C, 8) * 8
    bytes_per_lane = c_pad * 4          # intermediates are f32 even for bf16 in
    if chunk is None:
        chunk = budget["block_cap"] // bytes_per_lane
    chunk = max(128, (min(int(chunk), Mp) // 128) * 128)
    num_chunks = pl.cdiv(Mp, chunk)

    # Parallel super-blocks: give each TensorCore at least one unit of
    # "parallel" grid work (N * ns >= num_tc on v7x), but don't fragment the
    # output / duplicate DMAs on single-TC chips (v5e/v6e).
    if num_super is None:
        ns_want = max(1, pl.cdiv(budget["num_tc"], N))
    else:
        ns_want = max(1, int(num_super))
    if ns_want > 1 and num_chunks < ns_want:
        chunk = max(128, (Mp // (ns_want * 128)) * 128)
        num_chunks = pl.cdiv(Mp, chunk)

    ns = max(1, min(ns_want, num_chunks))              # parallel super-blocks
    cps = pl.cdiv(num_chunks, ns)                      # chunks per super-block
    ns = pl.cdiv(num_chunks, cps)
    last_chunk = num_chunks - 1

    def in_map(n, s, k):
        # Clamp so overshoot steps of the last super-block stay in bounds;
        # their contribution is zeroed by the in-kernel mask.
        return (n, 0, jnp.minimum(s * cps + k, last_chunk))

    kernel = functools.partial(_dice_sums_kernel, use_sigmoid=use_sigmoid,
                               chunk=chunk, chunks_per_super=cps, num_valid=M)

    partial_sums = pl.pallas_call(
        kernel,
        out_shape=jax.ShapeDtypeStruct((N, ns, C, 3), jnp.float32),
        grid_spec=pltpu.PrefetchScalarGridSpec(
            num_scalar_prefetch=0,
            grid=(N, ns, cps),
            in_specs=[
                pl.BlockSpec((pl.Squeezed(), C, chunk), in_map),
                pl.BlockSpec((pl.Squeezed(), 1, chunk), in_map),
            ],
            out_specs=pl.BlockSpec((pl.Squeezed(), pl.Squeezed(), C, 3),
                                   lambda n, s, k: (n, s, 0, 0)),
        ),
        compiler_params=pltpu.CompilerParams(
            dimension_semantics=("parallel", "parallel", "arbitrary"),
            vmem_limit_bytes=budget["vmem_limit"]),
    )(logits_ncm, labels_n1m)

    # Tiny (N, ns, C, 3) finish in plain JAX.
    return jnp.sum(partial_sums, axis=(0, 1))          # (C, 3)


class AbstractDiceLossPallas:
    """JAX/Pallas port of _AbstractDiceLoss.forward.

    `dice()` is abstract in the PyTorch base class; the standard per-channel
    dice used by the concrete DiceLoss subclass is implemented here (sigmoid
    or softmax normalization).
    """

    def __init__(self, classes, loss_weight=1.0, class_weight=None,
                 use_sigmoid=True, reduction='mean', avg_factor=None,
                 chunk=None, num_super=None):
        self.classes = classes
        self.skip_index_after = None     # TODO(synk): skip_target_channels path not implemented.
        self.loss_weight = float(loss_weight)
        self.use_sigmoid = use_sigmoid
        self.reduction = reduction
        self.avg_factor = avg_factor
        self.background_as_first_channel = True
        self.chunk = chunk               # None -> auto from per-generation VMEM budget
        self.num_super = num_super       # None -> auto (>=2 parallel units on v7x)
        if class_weight is not None:
            if len(class_weight) != classes:
                raise ValueError("class_weight length must equal classes")
            self.class_weight = jnp.asarray(class_weight, dtype=jnp.float32)
        else:
            self.class_weight = None

    def __call__(self, logits, target_labels, weight=None, avg_factor=None,
                 reduction_override=None, ignore_index=None):
        # logits: (N, C, D, H, W) float; target_labels: (N, D, H, W) int
        assert reduction_override in (None, 'none', 'mean', 'sum')
        # TODO(synk): ignore_index handling of expand_as_one_hot is not implemented.
        assert ignore_index is None
        reduction = reduction_override if reduction_override else self.reduction
        avg_factor = avg_factor if avg_factor is not None else self.avg_factor

        N, C, D, H, W = logits.shape
        assert C == self.classes
        Mv = D * H * W

        # Zero-copy reshapes: channel stays on sublanes, voxels on lanes.
        x3 = logits.reshape(N, C, Mv)
        lab3 = target_labels.reshape(N, 1, Mv)
        if not jnp.issubdtype(lab3.dtype, jnp.integer):
            lab3 = lab3.astype(jnp.int32)
        # int8/int16/int32 labels are consumed as-is (cast after load in-kernel)
        # to avoid an extra wrapper-side HBM pass on this mem-bound kernel.

        sums = _per_channel_dice_sums(x3, lab3, use_sigmoid=self.use_sigmoid,
                                      chunk=self.chunk,
                                      num_super=self.num_super)
        intersect, sum_pp, sum_tt = sums[:, 0], sums[:, 1], sums[:, 2]

        per_channel_dice = 2.0 * intersect / jnp.maximum(sum_pp + sum_tt, _EPS)
        loss_per_channel = 1.0 - per_channel_dice

        # weight_reduce_loss(loss, weight=class_weight, reduction, avg_factor)
        weighted = loss_per_channel
        if self.class_weight is not None:
            weighted = weighted * self.class_weight
        if avg_factor is None:
            if reduction == 'mean':
                reduced = jnp.mean(weighted)
            elif reduction == 'sum':
                reduced = jnp.sum(weighted)
            else:               # 'none'
                reduced = weighted
        else:
            if reduction == 'mean':
                reduced = jnp.sum(weighted) / avg_factor
            elif reduction == 'none':
                reduced = weighted
            else:
                raise ValueError('avg_factor can not be used with reduction="sum"')
        loss = self.loss_weight * reduced

        out = {'loss_seg': loss}
        for i in range(C):
            out['{}_Channel'.format(i)] = per_channel_dice[i]
        return out


def _reference_forward(logits, labels, class_weight, loss_weight,
                       use_sigmoid=True):
    """Pure-JAX reference mirroring the PyTorch semantics."""
    N, C, D, H, W = logits.shape
    one_hot = jax.nn.one_hot(labels, C, axis=1, dtype=jnp.float32)  # (N,C,D,H,W)
    xf = logits.astype(jnp.float32)
    p = jax.nn.sigmoid(xf) if use_sigmoid else jax.nn.softmax(xf, axis=1)
    pf = jnp.transpose(p, (1, 0, 2, 3, 4)).reshape(C, -1)
    tf = jnp.transpose(one_hot, (1, 0, 2, 3, 4)).reshape(C, -1)
    intersect = jnp.sum(pf * tf, axis=1)
    denom = jnp.sum(pf * pf, axis=1) + jnp.sum(tf * tf, axis=1)
    dice = 2.0 * intersect / jnp.maximum(denom, _EPS)
    w = class_weight if class_weight is not None else jnp.ones((C,), jnp.float32)
    loss = loss_weight * jnp.mean((1.0 - dice) * w)
    return dice, loss


if __name__ == "__main__":
    key = jax.random.PRNGKey(0)
    k1, k2 = jax.random.split(key)

    N, C, D, H, W = 2, 4, 8, 16, 12          # 1536 voxels per sample
    logits = jax.random.normal(k1, (N, C, D, H, W), dtype=jnp.float32)
    labels = jax.random.randint(k2, (N, D, H, W), 0, C, dtype=jnp.int32)

    class_weight = [0.25, 0.5, 0.75, 1.0]
    loss_weight = 1.0
    cw = jnp.asarray(class_weight, jnp.float32)

    # 1) Sigmoid path with a small explicit chunk so multi-chunk accumulation,
    #    the parallel super-block axis, and the clamped/masked overshoot chunk
    #    are all exercised (3 chunks split over 2 super-blocks of 2).
    module = AbstractDiceLossPallas(classes=C, loss_weight=loss_weight,
                                    class_weight=class_weight,
                                    use_sigmoid=True, reduction='mean',
                                    chunk=512, num_super=2)
    result = module(logits, labels)
    jax.block_until_ready(result['loss_seg'])

    ref_dice, ref_loss = _reference_forward(logits, labels, cw, loss_weight,
                                            use_sigmoid=True)
    got_dice = jnp.stack([result['{}_Channel'.format(i)] for i in range(C)])
    assert jnp.allclose(got_dice, ref_dice, rtol=1e-4, atol=1e-5), (got_dice, ref_dice)
    assert jnp.allclose(result['loss_seg'], ref_loss, rtol=1e-4, atol=1e-5), (
        result['loss_seg'], ref_loss)

    # 2) Softmax path with auto block sizing (whole volume in one block here).
    #    Slightly looser tolerance because the softmax denominator uses the
    #    EUP approximate reciprocal.
    module_sm = AbstractDiceLossPallas(classes=C, loss_weight=loss_weight,
                                       class_weight=class_weight,
                                       use_sigmoid=False, reduction='mean')
    result_sm = module_sm(logits, labels)
    jax.block_until_ready(result_sm['loss_seg'])

    ref_dice_sm, ref_loss_sm = _reference_forward(logits, labels, cw,
                                                  loss_weight, use_sigmoid=False)
    got_dice_sm = jnp.stack([result_sm['{}_Channel'.format(i)] for i in range(C)])
    assert jnp.allclose(got_dice_sm, ref_dice_sm, rtol=5e-3, atol=1e-4), (
        got_dice_sm, ref_dice_sm)
    assert jnp.allclose(result_sm['loss_seg'], ref_loss_sm, rtol=5e-3, atol=1e-4), (
        result_sm['loss_seg'], ref_loss_sm)

    print("KERNEL_OK")
</pallas_src>

<mosaic_0001>
module attributes {stable_mosaic.version = 11 : i64} {
  func.func @_dice_sums_kernel(%arg0: i32, %arg1: i32, %arg2: i32, %arg3: memref<1x4x512xf32, #tpu.memory_space<vmem>>, %arg4: memref<1x1x512xi32, #tpu.memory_space<vmem>>, %arg5: memref<1x1x4x3xf32, #tpu.memory_space<vmem>>) attributes {dimension_semantics = [#tpu.dimension_semantics<parallel>, #tpu.dimension_semantics<parallel>, #tpu.dimension_semantics<arbitrary>], iteration_bounds = array<i64: 2, 2, 2>, scalar_prefetch = 0 : i64, scratch_operands = 0 : i64, tpu.core_type = #tpu.core_type<tc>, window_params = [{transform_indices = @transform_0, window_bounds = array<i64: 1, 4, 512>}, {transform_indices = @transform_1, window_bounds = array<i64: 1, 1, 512>}, {transform_indices = @transform_2, window_bounds = array<i64: 1, 1, 4, 3>}]} {
    %c0_i32 = arith.constant 0 : i32
    %0 = arith.cmpi eq, %arg2, %c0_i32 : i32
    %1 = arith.extui %0 : i1 to i32
    %c0_i32_0 = arith.constant 0 : i32
    %2 = arith.cmpi ne, %1, %c0_i32_0 : i32
    scf.if %2 {
      %cst_18 = arith.constant 0.000000e+00 : f32
      %47 = vector.broadcast %cst_18 : f32 to vector<4x3xf32>
      %c0_19 = arith.constant 0 : index
      %c0_20 = arith.constant 0 : index
      %c0_21 = arith.constant 0 : index
      %c0_22 = arith.constant 0 : index
      %48 = vector.load %arg5[%c0_19, %c0_20, %c0_21, %c0_22] : memref<1x1x4x3xf32, #tpu.memory_space<vmem>>, vector<1x1x4x3xf32>
      %49 = vector.shape_cast %48 : vector<1x1x4x3xf32> to vector<4x3xf32>
      %50 = vector.shape_cast %47 : vector<4x3xf32> to vector<1x1x4x3xf32>
      tpu.vector_store %arg5[%c0_19, %c0_20, %c0_21, %c0_22], %50 {strides = array<i32>} : memref<1x1x4x3xf32, #tpu.memory_space<vmem>>, vector<1x1x4x3xf32>,
    } else {
    }
    %c2_i32 = arith.constant 2 : i32
    %3 = arith.muli %arg1, %c2_i32 : i32
    %4 = arith.addi %3, %arg2 : i32
    %c512_i32 = arith.constant 512 : i32
    %5 = arith.muli %4, %c512_i32 : i32
    %6 = tpu.iota {dimensions = array<i32: 1>} : vector<1x512xi32>
    %7 = vector.broadcast %5 : i32 to vector<1x512xi32>
    %8 = arith.addi %7, %6 : vector<1x512xi32>
    %c1536_i32 = arith.constant 1536 : i32
    %9 = vector.broadcast %c1536_i32 : i32 to vector<1x512xi32>
    %10 = arith.cmpi slt, %8, %9 : vector<1x512xi32>
    %11 = arith.extui %10 : vector<1x512xi1> to vector<1x512xi32>
    %12 = arith.sitofp %11 : vector<1x512xi32> to vector<1x512xf32>
    %c0 = arith.constant 0 : index
    %c0_1 = arith.constant 0 : index
    %c0_2 = arith.constant 0 : index
    %13 = vector.load %arg3[%c0, %c0_1, %c0_2] : memref<1x4x512xf32, #tpu.memory_space<vmem>>, vector<1x4x512xf32>
    %14 = vector.shape_cast %13 : vector<1x4x512xf32> to vector<4x512xf32>
    %15 = arith.negf %14 : vector<4x512xf32>
    %16 = math.exp %15 : vector<4x512xf32>
    %cst = arith.constant 1.000000e+00 : f32
    %17 = vector.broadcast %cst : f32 to vector<4x512xf32>
    %18 = arith.addf %17, %16 : vector<4x512xf32>
    %19 = arith.divf %17, %18 : vector<4x512xf32>
    %c0_3 = arith.constant 0 : index
    %c0_4 = arith.constant 0 : index
    %c0_5 = arith.constant 0 : index
    %20 = vector.load %arg4[%c0_3, %c0_4, %c0_5] : memref<1x1x512xi32, #tpu.memory_space<vmem>>, vector<1x1x512xi32>
    %21 = vector.shape_cast %20 : vector<1x1x512xi32> to vector<1x512xi32>
    %22 = tpu.iota {dimensions = array<i32: 0>} : vector<4x512xi32>
    %23 = vector.broadcast %21 : vector<1x512xi32> to vector<4x512xi32>
    %24 = arith.cmpi eq, %23, %22 : vector<4x512xi32>
    %25 = vector.broadcast %10 : vector<1x512xi1> to vector<4x512xi1>
    %26 = arith.andi %24, %25 : vector<4x512xi1>
    %27 = vector.broadcast %12 : vector<1x512xf32> to vector<4x512xf32>
    %28 = arith.mulf %19, %27 : vector<4x512xf32>
    %cst_6 = arith.constant 0.000000e+00 : f32
    %29 = vector.broadcast %cst_6 : f32 to vector<4x512xf32>
    %30 = arith.select %26, %19, %29 : vector<4x512xi1>, vector<4x512xf32>
    %cst_7 = arith.constant dense<0.000000e+00> : vector<4xf32>
    %31 = vector.multi_reduction <add>, %30, %cst_7 [1] : vector<4x512xf32> to vector<4xf32>
    %32 = vector.shape_cast %31 : vector<4xf32> to vector<4x1xf32>
    %33 = arith.mulf %28, %28 : vector<4x512xf32>
    %cst_8 = arith.constant dense<0.000000e+00> : vector<4xf32>
    %34 = vector.multi_reduction <add>, %33, %cst_8 [1] : vector<4x512xf32> to vector<4xf32>
    %35 = vector.shape_cast %34 : vector<4xf32> to vector<4x1xf32>
    %36 = arith.extui %26 : vector<4x512xi1> to vector<4x512xi32>
    %37 = arith.sitofp %36 : vector<4x512xi32> to vector<4x512xf32>
    %cst_9 = arith.constant dense<0.000000e+00> : vector<4xf32>
    %38 = vector.multi_reduction <add>, %37, %cst_9 [1] : vector<4x512xf32> to vector<4xf32>
    %39 = vector.shape_cast %38 : vector<4xf32> to vector<4x1xf32>
    %c0_10 = arith.constant 0 : index
    %c0_11 = arith.constant 0 : index
    %c0_12 = arith.constant 0 : index
    %c0_13 = arith.constant 0 : index
    %40 = vector.load %arg5[%c0_10, %c0_11, %c0_12, %c0_13] : memref<1x1x4x3xf32, #tpu.memory_space<vmem>>, vector<1x1x4x3xf32>
    %41 = vector.shape_cast %40 : vector<1x1x4x3xf32> to vector<4x3xf32>
    %42 = tpu.concatenate %32, %35, %39 in 1 : vector<4x1xf32>, vector<4x1xf32>, vector<4x1xf32> -> vector<4x3xf32>
    %43 = arith.addf %41, %42 : vector<4x3xf32>
    %c0_14 = arith.constant 0 : index
    %c0_15 = arith.constant 0 : index
    %c0_16 = arith.constant 0 : index
    %c0_17 = arith.constant 0 : index
    %44 = vector.load %arg5[%c0_14, %c0_15, %c0_16, %c0_17] : memref<1x1x4x3xf32, #tpu.memory_space<vmem>>, vector<1x1x4x3xf32>
    %45 = vector.shape_cast %44 : vector<1x1x4x3xf32> to vector<4x3xf32>
    %46 = vector.shape_cast %43 : vector<4x3xf32> to vector<1x1x4x3xf32>
    tpu.vector_store %arg5[%c0_14, %c0_15, %c0_16, %c0_17], %46 {strides = array<i32>} : memref<1x1x4x3xf32, #tpu.memory_space<vmem>>, vector<1x1x4x3xf32>,
    return
  }
  func.func @transform_0(%arg0: i32, %arg1: i32, %arg2: i32) -> (i32, i32, i32) {
    %c2_i32 = arith.constant 2 : i32
    %0 = arith.muli %arg1, %c2_i32 : i32
    %1 = arith.addi %0, %arg2 : i32
    %c2_i32_0 = arith.constant 2 : i32
    %2 = arith.minsi %1, %c2_i32_0 : i32
    %c0_i32 = arith.constant 0 : i32
    %c0_i32_1 = arith.constant 0 : i32
    return %arg0, %c0_i32, %2 : i32, i32, i32
  }
  func.func @transform_1(%arg0: i32, %arg1: i32, %arg2: i32) -> (i32, i32, i32) {
    %c2_i32 = arith.constant 2 : i32
    %0 = arith.muli %arg1, %c2_i32 : i32
    %1 = arith.addi %0, %arg2 : i32
    %c2_i32_0 = arith.constant 2 : i32
    %2 = arith.minsi %1, %c2_i32_0 : i32
    %c0_i32 = arith.constant 0 : i32
    %c0_i32_1 = arith.constant 0 : i32
    return %arg0, %c0_i32, %2 : i32, i32, i32
  }
  func.func @transform_2(%arg0: i32, %arg1: i32, %arg2: i32) -> (i32, i32, i32, i32) {
    %c0_i32 = arith.constant 0 : i32
    %c0_i32_0 = arith.constant 0 : i32
    %c0_i32_1 = arith.constant 0 : i32
    return %arg0, %arg1, %c0_i32, %c0_i32_0 : i32, i32, i32, i32
  }
}

</mosaic_0001>

<llo_original>
// kernel: tpu_custom_call.1
$region0: #{tpu_custom_call.1}
  #allocation0 [shape = 'u32[]', space=smem, size = 0x4, offset = 0x4, fixed_abs, tag = 'smem constant byte address 0x4 - core index']
  #allocation1 [shape = 'u32[144,128]{1,0:T(1,128)}', space=vmem, size = 0x12000, scoped, tag = 'internal scratch']
  %s0 = inlined_call_operand.hbm [shape: f32[2,4,1536], index: 0, kind: input, shape index: {}]
  %s1 = inlined_call_operand.hbm [shape: s32[2,1,1536], index: 1, kind: input, shape index: {}]
  %s2 = inlined_call_operand.vmem [shape: f32[2,2,4,3], index: 2, kind: output, shape index: {}]
  %s3 = sld [smem:[#allocation0]]
  $region53: #{tpu_custom_call.1} parent=0
    _
  %s5 = ssub.s32 1, %s3
  %s6 = scalar_select 0, %s5, %s3
  $region1: #{tpu_custom_call.1} parent=0
    #allocation2 [shape = 'u8[16384]{0}', space=vmem, size = 0x4000, scoped, tag = 'input window, operand 0']
    #allocation3 [shape = 's32[2]{0}', space=sflag, size = 0x8, scoped, tag = 'scoped memory for tpu_custom_call.1']
    #allocation4 [shape = 'u8[4096]{0}', space=vmem, size = 0x1000, scoped, tag = 'input window, operand 1']
    #allocation5 [shape = 's32[2]{0}', space=sflag, size = 0x8, scoped, tag = 'scoped memory for tpu_custom_call.1']
    %7 = vsyncpa [#allocation3], 0
    %s8 = scalar_lea.sflag [#allocation3], 1
    %9 = vsyncpa %s8, 0
    %10 = vsyncpa [#allocation5], 0
    %s11 = scalar_lea.sflag [#allocation5], 1
    %12 = vsyncpa %s11, 0
    loop: start=0, step=1, limit=10
    $region2: #{tpu_custom_call.1} parent=1 // loop_pre_header
      _
    $region3: #{tpu_custom_call.1} parent=1 // loop_header
      %s14 = sphi 0, %s18
      %p15 = scmp.ge.s32.totalorder %s14, 10
      %s21 = sphi 0, %s40
      %s22 = sphi 0, %s36
      %s23 = sphi 0, %s32
      %s24 = sphi 0, %s21
      %s25 = sphi 0, %s22
      %s26 = sphi 0, %s23
      %s27 = sphi 0, %s24
      %s28 = sphi 0, %s25
      %s29 = sphi 0, %s26
      %s53 = sphi 0, %s55
      %s56 = sphi 0, %s53
      %s57 = sphi 0, %s56
      %s73 = sphi 0, %s57
      %s89 = sphi 0, %s91
      %s92 = sphi 0, %s89
      %s93 = sphi 0, %s92
      %s109 = sphi 0, %s93
      %s117 = sphi 0, %s119
      %s120 = sphi 0, %s117
      %s121 = sphi 0, %s120
      %s137 = sphi 0, %s121
    $region4: #{tpu_custom_call.1} parent=1 // loop_header_branch
      %17 = sbr.rel (%p15) target = $region8
    $region5: #{tpu_custom_call.1} parent=1 // loop_body
      %s19 = ssub.s32 %s14, 1
      %s20 = ssub.s32 %s14, 2
      %s30 = sadd.s32 1, %s23
      %p31 = scmp.ge.s32.totalorder %s30, 2
      %s32 = scalar_select %p31, 0, %s30
      %s33 = sadd.s32 1, %s22
      %s34 = scalar_select %p31, %s33, %s22
      %p35 = scmp.ge.s32.totalorder %s34, 2
      %s36 = scalar_select %p35, 0, %s34
      %s37 = sadd.s32 1, %s21
      %s38 = scalar_select %p35, %s37, %s21
      %p39 = scmp.ge.s32.totalorder %s38, 2
      %s40 = scalar_select %p39, 0, %s38
      %s41 = smul.u32 %s22, 2
      %s42 = sadd.s32 %s41, %s23
      %p43 = scmp.lt.s32.totalorder %s42, 2
      %s44 = scalar_select %p43, %s42, 2
      %s45 = smul.u32 %s36, 2
      %s46 = sadd.s32 %s45, %s32
      %p47 = scmp.lt.s32.totalorder %s46, 2
      %s48 = scalar_select %p47, %s46, 2
      %s49 = ssub.s32 %s21, %s40
      %s50 = ssub.s32 %s44, %s48
      %s51 = sor.u32 %s49, %s50
      %p52 = scmp.eq.s32.totalorder %s51, 0
      %s54 = sadd.s32 %s53, 1
      %s55 = scalar_select %p52, %s53, %s54
      %p58 = pneg %p52
      %p59 = scmp.eq.s32.totalorder %s14, 7
      %p60 = por %p58, %p59
      %p61 = scmp.ne.s32.totalorder %s53, %s56
      %p62 = scmp.eq.s32.totalorder %s14, 0
      %p63 = por %p61, %p62
      %p64 = scmp.ne.s32.totalorder %s53, %s56
      %p65 = scmp.eq.s32.totalorder %s19, 7
      %p66 = por %p64, %p65
      %p67 = scmp.ne.s32.totalorder %s56, %s57
      %p68 = scmp.eq.s32.totalorder %s19, 0
      %p69 = por %p67, %p68
      %p70 = scmp.ne.s32.totalorder %s56, %s57
      %p71 = scmp.eq.s32.totalorder %s20, 7
      %p72 = por %p70, %p71
      %p74 = scmp.ne.s32.totalorder %s57, %s73
      %p75 = scmp.eq.s32.totalorder %s20, 0
      %p76 = por %p74, %p75
      %s77 = smul.u32 %s22, 2
      %s78 = sadd.s32 %s77, %s23
      %p79 = scmp.lt.s32.totalorder %s78, 2
      %s80 = scalar_select %p79, %s78, 2
      %s81 = smul.u32 %s36, 2
      %s82 = sadd.s32 %s81, %s32
      %p83 = scmp.lt.s32.totalorder %s82, 2
      %s84 = scalar_select %p83, %s82, 2
      %s85 = ssub.s32 %s21, %s40
      %s86 = ssub.s32 %s80, %s84
      %s87 = sor.u32 %s85, %s86
      %p88 = scmp.eq.s32.totalorder %s87, 0
      %s90 = sadd.s32 %s89, 1
      %s91 = scalar_select %p88, %s89, %s90
      %p94 = pneg %p88
      %p95 = scmp.eq.s32.totalorder %s14, 7
      %p96 = por %p94, %p95
      %p97 = scmp.ne.s32.totalorder %s89, %s92
      %p98 = scmp.eq.s32.totalorder %s14, 0
      %p99 = por %p97, %p98
      %p100 = scmp.ne.s32.totalorder %s89, %s92
      %p101 = scmp.eq.s32.totalorder %s19, 7
      %p102 = por %p100, %p101
      %p103 = scmp.ne.s32.totalorder %s92, %s93
      %p104 = scmp.eq.s32.totalorder %s19, 0
      %p105 = por %p103, %p104
      %p106 = scmp.ne.s32.totalorder %s92, %s93
      %p107 = scmp.eq.s32.totalorder %s20, 7
      %p108 = por %p106, %p107
      %p110 = scmp.ne.s32.totalorder %s93, %s109
      %p111 = scmp.eq.s32.totalorder %s20, 0
      %p112 = por %p110, %p111
      %s113 = ssub.s32 %s21, %s40
      %s114 = ssub.s32 %s22, %s36
      %s115 = sor.u32 %s113, %s114
      %p116 = scmp.eq.s32.totalorder %s115, 0
      %s118 = sadd.s32 %s117, 1
      %s119 = scalar_select %p116, %s117, %s118
      %p122 = pneg %p116
      %p123 = scmp.eq.s32.totalorder %s14, 7
      %p124 = por %p122, %p123
      %p125 = scmp.ne.s32.totalorder %s117, %s120
      %p126 = scmp.eq.s32.totalorder %s14, 0
      %p127 = por %p125, %p126
      %p128 = scmp.ne.s32.totalorder %s117, %s120
      %p129 = scmp.eq.s32.totalorder %s19, 7
      %p130 = por %p128, %p129
      %p131 = scmp.ne.s32.totalorder %s120, %s121
      %p132 = scmp.eq.s32.totalorder %s19, 0
      %p133 = por %p131, %p132
      %p134 = scmp.ne.s32.totalorder %s120, %s121
      %p135 = scmp.eq.s32.totalorder %s20, 7
      %p136 = por %p134, %p135
      %p138 = scmp.ne.s32.totalorder %s121, %s137
      %p139 = scmp.eq.s32.totalorder %s20, 0
      %p140 = por %p138, %p139
      %p141 = scmp.le.s32.totalorder 1, %s14
      %p142 = scmp.lt.s32.totalorder %s14, 9
      %p143 = pnand %p141, %p142
      %p144 = pneg %p143
      // Predicated region
      $region9: #{tpu_custom_call.1} parent=5 // pred_check
        _
      $region10: #{tpu_custom_call.1} parent=5 // pred_check_branch
        %146 = sbr.rel (%p143) target = $region12
      $region11: #{tpu_custom_call.1} parent=5 // pred_region
        %s147 = ssub.s32 %s14, 1
      $region12: #{tpu_custom_call.1} parent=5 // pred_fallthru
        _
      %p148 = scmp.lt.s32.totalorder %s14, 8
      // Predicated region
      $region13: #{tpu_custom_call.1} parent=5 // pred_check
        %p149 = pneg %p148
      $region14: #{tpu_custom_call.1} parent=5 // pred_check_branch
        %151 = sbr.rel (%p149) target = $region16
      $region15: #{tpu_custom_call.1} parent=5 // pred_region
        // Predicated region
        $region17: #{tpu_custom_call.1} parent=15 // pred_check
          %p152 = pneg %p63
        $region18: #{tpu_custom_call.1} parent=15 // pred_check_branch
          %154 = sbr.rel (%p152) target = $region20
        $region19: #{tpu_custom_call.1} parent=15 // pred_region
          %s155 = sand.u32 %s53, 1
          %s156 = scalar_lea.sflag [#allocation3], %s155
          %s157 = sand.u32 %s53, 1
          %s158 = smul.addr %s157, 16
          %s159 = scalar_lea.vmem [#allocation2], %s158
          %s160 = smul.u32 %s22, 2
          %s161 = sadd.s32 %s160, %s23
          %p162 = scmp.lt.s32.totalorder %s161, 2
          %s163 = scalar_select %p162, %s161, 2
          %s164 = smul.u32 4, %s163
          %s166 = ssub.s32 256, 256
          %167 = vsyncadd %s156, %s166
          %s168 = smul.addr %s21, 12
          %s169 = sadd.s32 %s164, %s168
          %s170 = smul.addr %s169, 64
          %s171 = scalar_lea.hbm %s0, %s170
          %s173 = sshll.u32 %s159, 4
          %s174 = int_to_ptr.vmem [resolvable:$true] %s173
          %176 = dma.hbm_to_vmem [thread:$0]  %s171, 256, %s174, %s156
        $region20: #{tpu_custom_call.1} parent=15 // pred_fallthru
          _
        // Predicated region
        $region21: #{tpu_custom_call.1} parent=15 // pred_check
          %p177 = pneg %p99
        $region22: #{tpu_custom_call.1} parent=15 // pred_check_branch
          %179 = sbr.rel (%p177) target = $region24
        $region23: #{tpu_custom_call.1} parent=15 // pred_region
          %s180 = sand.u32 %s89, 1
          %s181 = scalar_lea.sflag [#allocation5], %s180
          %s182 = sand.u32 %s89, 1
          %s183 = smul.addr %s182, 4
          %s184 = scalar_lea.vmem [#allocation4], %s183
          %s185 = smul.u32 %s22, 2
          %s186 = sadd.s32 %s185, %s23
          %p187 = scmp.lt.s32.totalorder %s186, 2
          %s188 = scalar_select %p187, %s186, 2
          %s189 = smul.u32 4, %s188
          %s191 = ssub.s32 64, 64
          %192 = vsyncadd %s181, %s191
          %s193 = smul.addr %s21, 12
          %s194 = sadd.s32 %s189, %s193
          %s195 = smul.addr %s194, 16
          %s196 = scalar_lea.hbm %s1, %s195
          %s198 = sshll.u32 %s184, 4
          %s199 = int_to_ptr.vmem [resolvable:$true] %s198
          %201 = dma.hbm_to_vmem [thread:$0]  %s196, 64, %s199, %s181
        $region24: #{tpu_custom_call.1} parent=15 // pred_fallthru
          _
      $region16: #{tpu_custom_call.1} parent=5 // pred_fallthru
        _
      %p202 = scmp.le.s32.totalorder 1, %s14
      %p203 = scmp.lt.s32.totalorder %s14, 9
      %p204 = pnand %p202, %p203
      %p205 = pneg %p204
      // Predicated region
      $region25: #{tpu_custom_call.1} parent=5 // pred_check
        _
      $region26: #{tpu_custom_call.1} parent=5 // pred_check_branch
        %207 = sbr.rel (%p204) target = $region28
      $region27: #{tpu_custom_call.1} parent=5 // pred_region
        %s208 = ssub.s32 %s14, 1
        %s209 = sand.u32 %s56, 1
        %s210 = scalar_lea.sflag [#allocation3], %s209
        %s211 = sand.u32 %s56, 1
        %s212 = smul.addr %s211, 16
        %s213 = scalar_lea.vmem [#allocation2], %s212
        // Predicated region
        $region29: #{tpu_custom_call.1} parent=27 // pred_check
          %p214 = pneg %p69
        $region30: #{tpu_custom_call.1} parent=27 // pred_check_branch
          %216 = sbr.rel (%p214) target = $region32
        $region31: #{tpu_custom_call.1} parent=27 // pred_region
          %217 = dma.done %s210, 256
        $region32: #{tpu_custom_call.1} parent=27 // pred_fallthru
          _
        %s218 = sand.u32 %s92, 1
        %s219 = scalar_lea.sflag [#allocation5], %s218
        %s220 = sand.u32 %s92, 1
        %s221 = smul.addr %s220, 4
        %s222 = scalar_lea.vmem [#allocation4], %s221
        // Predicated region
        $region33: #{tpu_custom_call.1} parent=27 // pred_check
          %p223 = pneg %p105
        $region34: #{tpu_custom_call.1} parent=27 // pred_check_branch
          %225 = sbr.rel (%p223) target = $region36
        $region35: #{tpu_custom_call.1} parent=27 // pred_region
          %226 = dma.done %s219, 64
        $region36: #{tpu_custom_call.1} parent=27 // pred_fallthru
          _
        %s227 = sand.u32 %s56, 1
        %s228 = scalar_lea.sflag [#allocation3], %s227
        %s229 = sand.u32 %s56, 1
        %s230 = smul.addr %s229, 16
        %s231 = scalar_lea.vmem [#allocation2], %s230
        %p232 = pneg %p69
        %p233 = pneg %p66
        %s234 = sand.u32 %s92, 1
        %s235 = scalar_lea.sflag [#allocation5], %s234
        %s236 = sand.u32 %s92, 1
        %s237 = smul.addr %s236, 4
        %s238 = scalar_lea.vmem [#allocation4], %s237
        %p239 = pneg %p105
        %p240 = pneg %p102
        %p241 = pneg %p133
        %p242 = pneg %p130
        %p243 = scmp.lt.s32.totalorder %s24, 1
        %s244 = scalar_select %p243, %s24, 1
        %p245 = scmp.lt.s32.totalorder %s25, 1
        %s246 = scalar_select %p245, %s25, 1
        %s247 = smul.addr %s244, 2
        %s248 = sadd.s32 %s246, %s247
        %s249 = smul.addr %s248, 4
        %s250 = scalar_lea.vmem %s2, %s249
        %s251 = smul.u32 %s25, 2
        %s252 = sadd.s32 %s251, %s26
        %p253 = scmp.lt.s32.totalorder %s252, 2
        %s254 = scalar_select %p253, %s252, 2
        %s255 = smul.u32 4, %s254
        %s256 = smul.u32 %s25, 2
        %s257 = sadd.s32 %s256, %s26
        %p258 = scmp.lt.s32.totalorder %s257, 2
        %s259 = scalar_select %p258, %s257, 2
        %s260 = smul.u32 4, %s259
        %p261 = scmp.lt.s32.totalorder %s24, 1
        %s262 = scalar_select %p261, %s24, 1
        %p263 = scmp.lt.s32.totalorder %s25, 1
        %s264 = scalar_select %p263, %s25, 1
        %s265 = smul.addr %s262, 2
        %s266 = sadd.s32 %s264, %s265
        %s267 = smul.addr %s266, 4
        %s268 = scalar_lea.vmem %s2, %s267
        %p269 = scmp.eq.s32.totalorder %s26, 0
        // Predicated region
        $region37: #{tpu_custom_call.1} parent=27 // pred_check
          %p270 = pneg %p269
        $region38: #{tpu_custom_call.1} parent=27 // pred_check_branch
          %272 = sbr.rel (%p270) target = $region40
        $region39: #{tpu_custom_call.1} parent=27 // pred_region
          %vm273 = vcmask 19456
          %274 = vst.msk [vmem:[%s268] sm:$0xf] %vm273, 0.0
        $region40: #{tpu_custom_call.1} parent=27 // pred_fallthru
          _
        %s275 = smul.u32 %s25, 2
        %s276 = sadd.s32 %s275, %s26
        %s277 = smul.u32 %s276, 512
        %v278 = vlaneseq
        %v279 = vand.u32 %v278, 127
        %v280 = vadd.s32 %v279, 128
        %v281 = vadd.s32 %v279, 256
        %v282 = vadd.s32 %v279, 384
        %v283 = vstv %s277
        %v284 = vadd.s32 %v283, %v279
        %v285 = vadd.s32 %v283, %v280
        %v286 = vadd.s32 %v283, %v281
        %v287 = vadd.s32 %v283, %v282
        %vm288 = vcmp.lt.s32.totalorder %v284, 1536
        %vm289 = vcmp.lt.s32.totalorder %v285, 1536
        %vm290 = vcmp.lt.s32.totalorder %v286, 1536
        %vm291 = vcmp.lt.s32.totalorder %v287, 1536
        %v292 = vsel %vm288, 1, 0
        %v293 = vsel %vm289, 1, 0
        %v294 = vsel %vm290, 1, 0
        %v295 = vsel %vm291, 1, 0
        %v296 = vcvt.s32.f32 %v292
        %v297 = vcvt.s32.f32 %v293
        %v298 = vcvt.s32.f32 %v294
        %v299 = vcvt.s32.f32 %v295
        %v300 = vld [vmem:[%s213] sm:$0xff]
        %v301 = vld [vmem:[%s213 + $0x8] sm:$0xff]
        %v302 = vxor.u32 %v300, 2147483648
        %v303 = vxor.u32 %v301, 2147483648
        %v304 = vmul.f32 %v302, 1.442695
        %v305 = vpow.pop %v304
        %v306 = vmul.f32 %v303, 1.442695
        %v307 = vpow.pop %v306
        %v308 = vadd.f32 %v305, 1.0
        %v309 = vadd.f32 %v307, 1.0
        %v310 = vrcp.pop %v308
        %v311 = vmul.f32 1.0, %v310
        %v312 = vrcp.pop %v309
        %v313 = vmul.f32 1.0, %v312
        %v314 = vld [vmem:[%s222] sm:$0xf]
        %v315 = vlaneseq
        %v316 = vshrl.u32 %v315, 7
        %v317 = vlaneseq
        %v318 = vshrl.u32 %v317, 7
        %v319 = vsub.s32 0, %v318
        %v320 = vrot.slane %v314, %v319
        %v321 = vlaneseq
        %v322 = vshrl.u32 %v321, 7
        %v323 = vsub.s32 1, %v322
        %v324 = vrot.slane %v314, %v323
        %v325 = vlaneseq
        %v326 = vshrl.u32 %v325, 7
        %v327 = vsub.s32 2, %v326
        %v328 = vrot.slane %v314, %v327
        %v329 = vlaneseq
        %v330 = vshrl.u32 %v329, 7
        %v331 = vsub.s32 3, %v330
        %v332 = vrot.slane %v314, %v331
        %vm333 = vcmp.eq.s32.totalorder %v320, %v316
        %vm334 = vcmp.eq.s32.totalorder %v324, %v316
        %vm335 = vcmp.eq.s32.totalorder %v328, %v316
        %vm336 = vcmp.eq.s32.totalorder %v332, %v316
        %vm337 = vcmp.eq.s32.totalorder %v292, 1
        %vm338 = vcmp.eq.s32.totalorder %v293, 1
        %vm339 = vcmp.eq.s32.totalorder %v294, 1
        %vm340 = vcmp.eq.s32.totalorder %v295, 1
        %vm341 = vmand %vm333, %vm337
        %vm342 = vmand %vm334, %vm338
        %vm343 = vmand %vm335, %vm339
        %vm344 = vmand %vm336, %vm340
        %v349 = vcombine.low %v296, %v297
        %v350 = vcombine.low %v298, %v299
        %v353 = vmul.f32 %v311, %v349
        %v354 = vmul.f32 %v313, %v350
        %v357 = vcombine.high %v311, %v311
        %v358 = vcombine.high %v313, %v313
        %v361 = vsel %vm341, %v311, 0.0
        %v362 = vsel %vm342, %v357, 0.0
        %v363 = vsel %vm343, %v313, 0.0
        %v364 = vsel %vm344, %v358, 0.0
        %vm365 = vcmask 1043456
        %v366 = vsel %vm365, %v361, 0.0
        %v367 = vsel %vm365, %v362, 0.0
        %v368 = vadd.f32 %v366, %v367
        %v369 = vsel %vm365, %v363, 0.0
        %v370 = vadd.f32 %v368, %v369
        %v371 = vsel %vm365, %v364, 0.0
        %v372 = vadd.f32 %v370, %v371
        %373 = vadd.xlane.f32.xlu0 %v372
        %v374 = vpop.xlane.xlu0 %373
        %v375 = vmul.f32 %v353, %v353
        %v376 = vmul.f32 %v354, %v354
        %v379 = vcombine.high %v375, %v375
        %v380 = vcombine.high %v376, %v376
        %v383 = vsel %vm365, %v375, 0.0
        %v384 = vsel %vm365, %v379, 0.0
        %v385 = vadd.f32 %v383, %v384
        %v386 = vsel %vm365, %v376, 0.0
        %v387 = vadd.f32 %v385, %v386
        %v388 = vsel %vm365, %v380, 0.0
        %v389 = vadd.f32 %v387, %v388
        %390 = vadd.xlane.f32.xlu0 %v389
        %v391 = vpop.xlane.xlu0 %390
        %v392 = vsel %vm341, 1, 0
        %v393 = vsel %vm342, 1, 0
        %v394 = vsel %vm343, 1, 0
        %v395 = vsel %vm344, 1, 0
        %v396 = vcvt.s32.f32 %v392
        %v397 = vcvt.s32.f32 %v393
        %v398 = vcvt.s32.f32 %v394
        %v399 = vcvt.s32.f32 %v395
        %v400 = vsel %vm365, %v396, 0.0
        %v401 = vsel %vm365, %v397, 0.0
        %v402 = vadd.f32 %v400, %v401
        %v403 = vsel %vm365, %v398, 0.0
        %v404 = vadd.f32 %v402, %v403
        %v405 = vsel %vm365, %v399, 0.0
        %v406 = vadd.f32 %v404, %v405
        %407 = vadd.xlane.f32.xlu0 %v406
        %v408 = vpop.xlane.xlu0 %407
        %v409 = vld [vmem:[%s268] sm:$0xf]
        %vm410 = vcmask 7168
        %v411 = vsel %vm410, %v374, %v391
        %vm412 = vcmask 15360
        %v413 = vsel %vm412, %v411, %v408
        %v414 = vadd.f32 %v409, %v413
        %vm415 = vcmask 19456
        %416 = vst.msk [vmem:[%s268] sm:$0xf] %vm415, %v414
        %p417 = scmp.lt.s32.totalorder %s24, 1
        %s418 = scalar_select %p417, %s24, 1
        %p419 = scmp.lt.s32.totalorder %s25, 1
        %s420 = scalar_select %p419, %s25, 1
        %s421 = smul.addr %s418, 2
        %s422 = sadd.s32 %s420, %s421
        %s423 = smul.addr %s422, 4
        %s424 = scalar_lea.vmem %s2, %s423
        // Predicated region
        $region41: #{tpu_custom_call.1} parent=27 // pred_check
          %p425 = pneg %p130
        $region42: #{tpu_custom_call.1} parent=27 // pred_check_branch
          %427 = sbr.rel (%p425) target = $region44
        $region43: #{tpu_custom_call.1} parent=27 // pred_region
          _
        $region44: #{tpu_custom_call.1} parent=27 // pred_fallthru
          _
      $region28: #{tpu_custom_call.1} parent=5 // pred_fallthru
        _
      %p428 = scmp.le.s32.totalorder 2, %s14
      // Predicated region
      $region45: #{tpu_custom_call.1} parent=5 // pred_check
        %p429 = pneg %p428
      $region46: #{tpu_custom_call.1} parent=5 // pred_check_branch
        %431 = sbr.rel (%p429) target = $region48
      $region47: #{tpu_custom_call.1} parent=5 // pred_region
        %s432 = ssub.s32 %s14, 2
        // Predicated region
        $region49: #{tpu_custom_call.1} parent=47 // pred_check
          %p433 = pneg %p136
        $region50: #{tpu_custom_call.1} parent=47 // pred_check_branch
          %435 = sbr.rel (%p433) target = $region52
        $region51: #{tpu_custom_call.1} parent=47 // pred_region
          %p436 = scmp.lt.s32.totalorder %s27, 1
          %s437 = scalar_select %p436, %s27, 1
          %p438 = scmp.lt.s32.totalorder %s28, 1
          %s439 = scalar_select %p438, %s28, 1
          %s440 = smul.addr %s437, 2
          %s441 = sadd.s32 %s439, %s440
          %s442 = smul.addr %s441, 4
          %s443 = scalar_lea.vmem %s2, %s442
        $region52: #{tpu_custom_call.1} parent=47 // pred_fallthru
          _
      $region48: #{tpu_custom_call.1} parent=5 // pred_fallthru
        _
    $region6: #{tpu_custom_call.1} parent=1 // loop_footer
      %s18 = sadd.s32 1, %s14
    $region7: #{tpu_custom_call.1} parent=1 // loop_footer_branch
      %13 = sbr.rel target = $region3
    $region8: #{tpu_custom_call.1} parent=1 // loop_exit
      _
    %444 = vsyncpa [#allocation3], 1
    %s445 = scalar_lea.sflag [#allocation3], 1
    %446 = vsyncpa %s445, 1
    %447 = vsyncpa [#allocation5], 1
    %s448 = scalar_lea.sflag [#allocation5], 1
    %449 = vsyncpa %s448, 1

</llo_original>
